<compile_context>
chip_gen: v5e
topology: v5e:2x2
jax: 0.10.0
libtpu: 0.0.40
codegen_flags: <defaults>
</compile_context>

<pallas_src>
import math

import jax
import jax.numpy as jnp
import numpy as np
from jax.experimental import pallas as pl
from jax.experimental.pallas import tpu as pltpu


def _gfp_kernel(x_ref, w_ref, o_ref):
    # x_ref: (TB, 1) f32, w_ref: (1, E) f32, o_ref: (TB, 2E) f32
    E = w_ref.shape[1]
    t = x_ref[...] * w_ref[...]                  # (TB, E): t = x * W (no 2*pi)

    # Shared range reduction for sin(2*pi*t) and cos(2*pi*t):
    #   u = 2t, m = round(u), f = u - m in [-0.5, 0.5]  (both steps exact in f32)
    #   sin(pi*u) = (-1)^m * sin(pi*f),  cos(pi*u) = (-1)^m * cos(pi*f)
    u = t + t
    m = jnp.round(u)
    f = u - m
    theta = f * jnp.float32(math.pi)             # in [-pi/2, pi/2]
    s = theta * theta

    # sign = (-1)^m via parity of m (kept in float: no converts / selects)
    parity = m - 2.0 * jnp.floor(m * 0.5)        # 0.0 or 1.0
    sign = 1.0 - 2.0 * parity

    # Polynomials on [-pi/2, pi/2] (f32 accuracy).
    sin_p = theta * (1.0 + s * (-0.16666667 + s * (8.3333310e-3
                     + s * (-1.9841271e-4 + s * (2.7557314e-6
                     + s * (-2.5050760e-8))))))
    cos_p = 1.0 + s * (-0.5 + s * (4.1666668e-2 + s * (-1.3888889e-3
                     + s * (2.4801587e-5 + s * (-2.7557319e-7
                     + s * 2.0876757e-9)))))

    o_ref[:, :E] = sign * sin_p
    o_ref[:, E:] = sign * cos_p


def gaussian_fourier_projection(x, W, *, max_block_b=1024,
                                vmem_budget_bytes=8 * 1024 * 1024):
    """x: (B,) float, W: (E,) float -> (B, 2*E) float32.

    Matches torch: cat([sin(x[:,None]*W[None,:]*2*pi), cos(...)], dim=-1).
    """
    B = x.shape[0]
    E = W.shape[0]

    def _round_up(a, mult):
        return ((a + mult - 1) // mult) * mult

    w2 = W.astype(jnp.float32).reshape(1, E)
    x2 = x.astype(jnp.float32).reshape(B, 1)

    # Batch tile:
    #  * multiple of 8 sublanes
    #  * double-buffered (TB, 2E) f32 output tile stays within a conservative
    #    VMEM budget (safe on v5e/v6e/v7x scoped-VMEM defaults)
    #  * at most ceil(B/2) rows so the grid has >= 2 steps when B > 8, letting
    #    v7x's two TensorCores split the 'parallel' batch axis
    bytes_per_row = 2 * E * 4
    tb_budget = max(8, (vmem_budget_bytes // (2 * bytes_per_row)) // 8 * 8)
    b8 = _round_up(B, 8)
    tb_half = max(8, _round_up((b8 + 1) // 2, 8))
    TB = min(max_block_b, tb_budget, tb_half)

    Bp = _round_up(B, TB)
    if Bp != B:
        x2 = jnp.pad(x2, ((0, Bp - B), (0, 0)))

    out = pl.pallas_call(
        _gfp_kernel,
        out_shape=jax.ShapeDtypeStruct((Bp, 2 * E), jnp.float32),
        grid=(Bp // TB,),
        in_specs=[
            pl.BlockSpec((TB, 1), lambda i: (i, 0)),
            # Constant index_map -> W is DMA'd once and stays VMEM-resident.
            pl.BlockSpec((1, E), lambda i: (0, 0)),
        ],
        out_specs=pl.BlockSpec((TB, 2 * E), lambda i: (i, 0)),
        compiler_params=pltpu.CompilerParams(
            dimension_semantics=("parallel",),
        ),
    )(x2, w2)

    if Bp != B:
        out = out[:B]
    return out


def _reference_f64(x, W):
    """Float64 ground truth for sin/cos(2*pi * x * W) given f32 inputs."""
    x64 = np.asarray(x, dtype=np.float64)
    w64 = np.asarray(W, dtype=np.float64)
    xp = x64[:, None] * w64[None, :] * (2.0 * np.pi)
    return np.concatenate([np.sin(xp), np.cos(xp)], axis=-1)


if __name__ == "__main__":
    key = jax.random.PRNGKey(0)
    k_x, k_w, k_x2, k_w2 = jax.random.split(key, 4)

    # Module-default config: embedding_size=256, scale=1.0, small batch.
    embedding_size = 256
    scale = 1.0
    batch = 8

    W = jax.random.normal(k_w, (embedding_size,), dtype=jnp.float32) * scale
    x = jax.random.uniform(k_x, (batch,), dtype=jnp.float32) * 10.0

    out = jax.block_until_ready(gaussian_fourier_projection(x, W))
    ref = _reference_f64(x, W)
    assert out.shape == (batch, 2 * embedding_size)
    # Error budget: f32 rounding of x*W scales to ~1.4e-5 in the angle for the
    # largest |x*W| here; polynomial error ~1e-7.  1e-4 is comfortably above.
    assert np.max(np.abs(np.asarray(out, dtype=np.float64) - ref)) < 1e-4

    # Exercise non-multiple-of-128 E and batch padding / masked-store paths.
    W_odd = jax.random.normal(k_w2, (160,), dtype=jnp.float32) * scale
    x_odd = jax.random.uniform(k_x2, (20,), dtype=jnp.float32) * 10.0
    out_odd = jax.block_until_ready(gaussian_fourier_projection(x_odd, W_odd))
    ref_odd = _reference_f64(x_odd, W_odd)
    assert out_odd.shape == (20, 320)
    assert np.max(np.abs(np.asarray(out_odd, dtype=np.float64) - ref_odd)) < 1e-4

    print("KERNEL_OK")
</pallas_src>

<mosaic_0001>
module attributes {stable_mosaic.version = 11 : i64} {
  func.func @_gfp_kernel(%arg0: i32, %arg1: memref<8x1xf32, #tpu.memory_space<vmem>>, %arg2: memref<1x256xf32, #tpu.memory_space<vmem>>, %arg3: memref<8x512xf32, #tpu.memory_space<vmem>>) attributes {dimension_semantics = [#tpu.dimension_semantics<parallel>], iteration_bounds = array<i64: 1>, scalar_prefetch = 0 : i64, scratch_operands = 0 : i64, tpu.core_type = #tpu.core_type<tc>, window_params = [{transform_indices = @transform_0, window_bounds = array<i64: 8, 1>}, {pipeline_mode = #tpu.pipeline_mode<synchronous>, transform_indices = @transform_1, window_bounds = array<i64: 1, 256>}, {transform_indices = @transform_2, window_bounds = array<i64: 8, 512>}]} {
    %c0 = arith.constant 0 : index
    %c0_0 = arith.constant 0 : index
    %0 = vector.load %arg1[%c0, %c0_0] : memref<8x1xf32, #tpu.memory_space<vmem>>, vector<8x1xf32>
    %c0_1 = arith.constant 0 : index
    %c0_2 = arith.constant 0 : index
    %1 = vector.load %arg2[%c0_1, %c0_2] : memref<1x256xf32, #tpu.memory_space<vmem>>, vector<1x256xf32>
    %2 = vector.broadcast %0 : vector<8x1xf32> to vector<8x256xf32>
    %3 = vector.broadcast %1 : vector<1x256xf32> to vector<8x256xf32>
    %4 = arith.mulf %2, %3 : vector<8x256xf32>
    %5 = arith.addf %4, %4 : vector<8x256xf32>
    %6 = math.roundeven %5 : vector<8x256xf32>
    %7 = arith.subf %5, %6 : vector<8x256xf32>
    %cst = arith.constant 3.14159274 : f32
    %8 = vector.broadcast %cst : f32 to vector<8x256xf32>
    %9 = arith.mulf %7, %8 : vector<8x256xf32>
    %10 = arith.mulf %9, %9 : vector<8x256xf32>
    %cst_3 = arith.constant 5.000000e-01 : f32
    %11 = vector.broadcast %cst_3 : f32 to vector<8x256xf32>
    %12 = arith.mulf %6, %11 : vector<8x256xf32>
    %13 = math.floor %12 : vector<8x256xf32>
    %cst_4 = arith.constant 2.000000e+00 : f32
    %14 = vector.broadcast %cst_4 : f32 to vector<8x256xf32>
    %15 = arith.mulf %14, %13 : vector<8x256xf32>
    %16 = arith.subf %6, %15 : vector<8x256xf32>
    %cst_5 = arith.constant 2.000000e+00 : f32
    %17 = vector.broadcast %cst_5 : f32 to vector<8x256xf32>
    %18 = arith.mulf %17, %16 : vector<8x256xf32>
    %cst_6 = arith.constant 1.000000e+00 : f32
    %19 = vector.broadcast %cst_6 : f32 to vector<8x256xf32>
    %20 = arith.subf %19, %18 : vector<8x256xf32>
    %cst_7 = arith.constant -2.50507597E-8 : f32
    %21 = vector.broadcast %cst_7 : f32 to vector<8x256xf32>
    %22 = arith.mulf %10, %21 : vector<8x256xf32>
    %cst_8 = arith.constant 2.75573143E-6 : f32
    %23 = vector.broadcast %cst_8 : f32 to vector<8x256xf32>
    %24 = arith.addf %23, %22 : vector<8x256xf32>
    %25 = arith.mulf %10, %24 : vector<8x256xf32>
    %cst_9 = arith.constant -1.98412716E-4 : f32
    %26 = vector.broadcast %cst_9 : f32 to vector<8x256xf32>
    %27 = arith.addf %26, %25 : vector<8x256xf32>
    %28 = arith.mulf %10, %27 : vector<8x256xf32>
    %cst_10 = arith.constant 0.00833333097 : f32
    %29 = vector.broadcast %cst_10 : f32 to vector<8x256xf32>
    %30 = arith.addf %29, %28 : vector<8x256xf32>
    %31 = arith.mulf %10, %30 : vector<8x256xf32>
    %cst_11 = arith.constant -0.166666672 : f32
    %32 = vector.broadcast %cst_11 : f32 to vector<8x256xf32>
    %33 = arith.addf %32, %31 : vector<8x256xf32>
    %34 = arith.mulf %10, %33 : vector<8x256xf32>
    %cst_12 = arith.constant 1.000000e+00 : f32
    %35 = vector.broadcast %cst_12 : f32 to vector<8x256xf32>
    %36 = arith.addf %35, %34 : vector<8x256xf32>
    %37 = arith.mulf %9, %36 : vector<8x256xf32>
    %cst_13 = arith.constant 2.08767581E-9 : f32
    %38 = vector.broadcast %cst_13 : f32 to vector<8x256xf32>
    %39 = arith.mulf %10, %38 : vector<8x256xf32>
    %cst_14 = arith.constant -2.755732E-7 : f32
    %40 = vector.broadcast %cst_14 : f32 to vector<8x256xf32>
    %41 = arith.addf %40, %39 : vector<8x256xf32>
    %42 = arith.mulf %10, %41 : vector<8x256xf32>
    %cst_15 = arith.constant 2.48015876E-5 : f32
    %43 = vector.broadcast %cst_15 : f32 to vector<8x256xf32>
    %44 = arith.addf %43, %42 : vector<8x256xf32>
    %45 = arith.mulf %10, %44 : vector<8x256xf32>
    %cst_16 = arith.constant -0.00138888892 : f32
    %46 = vector.broadcast %cst_16 : f32 to vector<8x256xf32>
    %47 = arith.addf %46, %45 : vector<8x256xf32>
    %48 = arith.mulf %10, %47 : vector<8x256xf32>
    %cst_17 = arith.constant 0.0416666679 : f32
    %49 = vector.broadcast %cst_17 : f32 to vector<8x256xf32>
    %50 = arith.addf %49, %48 : vector<8x256xf32>
    %51 = arith.mulf %10, %50 : vector<8x256xf32>
    %cst_18 = arith.constant -5.000000e-01 : f32
    %52 = vector.broadcast %cst_18 : f32 to vector<8x256xf32>
    %53 = arith.addf %52, %51 : vector<8x256xf32>
    %54 = arith.mulf %10, %53 : vector<8x256xf32>
    %cst_19 = arith.constant 1.000000e+00 : f32
    %55 = vector.broadcast %cst_19 : f32 to vector<8x256xf32>
    %56 = arith.addf %55, %54 : vector<8x256xf32>
    %57 = arith.mulf %20, %37 : vector<8x256xf32>
    %c0_20 = arith.constant 0 : index
    %c0_21 = arith.constant 0 : index
    %58 = vector.load %arg3[%c0_20, %c0_21] : memref<8x512xf32, #tpu.memory_space<vmem>>, vector<8x256xf32>
    tpu.vector_store %arg3[%c0_20, %c0_21], %57 {strides = array<i32>} : memref<8x512xf32, #tpu.memory_space<vmem>>, vector<8x256xf32>,
    %59 = arith.mulf %20, %56 : vector<8x256xf32>
    %c0_22 = arith.constant 0 : index
    %c256 = arith.constant 256 : index
    %60 = vector.load %arg3[%c0_22, %c256] : memref<8x512xf32, #tpu.memory_space<vmem>>, vector<8x256xf32>
    tpu.vector_store %arg3[%c0_22, %c256], %59 {strides = array<i32>} : memref<8x512xf32, #tpu.memory_space<vmem>>, vector<8x256xf32>,
    return
  }
  func.func @transform_0(%arg0: i32) -> (i32, i32) {
    %c0_i32 = arith.constant 0 : i32
    %c0_i32_0 = arith.constant 0 : i32
    return %arg0, %c0_i32 : i32, i32
  }
  func.func @transform_1(%arg0: i32) -> (i32, i32) {
    %c0_i32 = arith.constant 0 : i32
    %c0_i32_0 = arith.constant 0 : i32
    %c0_i32_1 = arith.constant 0 : i32
    return %c0_i32, %c0_i32_0 : i32, i32
  }
  func.func @transform_2(%arg0: i32) -> (i32, i32) {
    %c0_i32 = arith.constant 0 : i32
    %c0_i32_0 = arith.constant 0 : i32
    return %arg0, %c0_i32 : i32, i32
  }
}

</mosaic_0001>

<llo_original>
// kernel: tpu_custom_call.1
$region0: #{tpu_custom_call.1}
  #allocation0 [shape = 'u32[]', space=smem, size = 0x4, offset = 0x4, fixed_abs, tag = 'smem constant byte address 0x4 - core index']
  #allocation1 [shape = 'u32[72,128]{1,0:T(1,128)}', space=vmem, size = 0x9000, scoped, tag = 'internal scratch']
  %s0 = inlined_call_operand.vmem [shape: f32[8,1], index: 0, kind: input, shape index: {}]
  %s1 = inlined_call_operand.vmem [shape: f32[1,256], index: 1, kind: input, shape index: {}]
  %s2 = inlined_call_operand.hbm [shape: f32[8,512], index: 2, kind: output, shape index: {}]
  %s3 = sld [smem:[#allocation0]]
  $region18: #{tpu_custom_call.1} parent=0
    _
  %s5 = ssub.s32 1, %s3
  %s6 = scalar_select 0, %s5, %s3
  $region1: #{tpu_custom_call.1} parent=0
    #allocation2 [shape = 'u8[16384]{0}', space=vmem, size = 0x4000, scoped, tag = 'output window, operand 0, single buffered']
    #allocation3 [shape = 's32[1]{0}', space=sflag, size = 0x4, scoped, tag = 'scoped memory for tpu_custom_call.1']
    %7 = vsyncpa [#allocation3], 0
    // Predicated region
    $region2: #{tpu_custom_call.1} parent=1 // pred_check
      _
    $region3: #{tpu_custom_call.1} parent=1 // pred_check_branch
      %9 = sbr.rel (0) target = $region5
    $region4: #{tpu_custom_call.1} parent=1 // pred_region
      _
    $region5: #{tpu_custom_call.1} parent=1 // pred_fallthru
      _
    // Predicated region
    $region6: #{tpu_custom_call.1} parent=1 // pred_check
      _
    $region7: #{tpu_custom_call.1} parent=1 // pred_check_branch
      %11 = sbr.rel (0) target = $region9
    $region8: #{tpu_custom_call.1} parent=1 // pred_region
      _
    $region9: #{tpu_custom_call.1} parent=1 // pred_fallthru
      _
    %v12 = vld [vmem:[%s0] sm:$0xff]
    %v13 = vld [vmem:[%s1] sm:$0x3]
    %15 = vset.pattern.permute.xlu0 0
    %16 = vperm.xlu0 %15, %v12
    %v17 = vpop.permute.xlu0 %16
    %v20 = vperm.slane %v13, 0
    %v21 = vperm.slane %v13, 1
    %v24 = vmul.f32 %v17, %v20
    %v25 = vmul.f32 %v17, %v21
    %v26 = vadd.f32 %v24, %v24
    %v27 = vadd.f32 %v25, %v25
    %v28 = vround.ne.pseudo %v26
    %v29 = vround.ne.pseudo %v27
    %v30 = vsub.f32 %v26, %v28
    %v31 = vsub.f32 %v27, %v29
    %v32 = vmul.f32 %v30, 3.1415927
    %v33 = vmul.f32 %v31, 3.1415927
    %v34 = vmul.f32 %v32, %v32
    %v35 = vmul.f32 %v33, %v33
    %v36 = vmul.f32 %v28, 0.5
    %v37 = vmul.f32 %v29, 0.5
    %v38 = vfloor.f32 %v36
    %v39 = vfloor.f32 %v37
    %v40 = vmul.f32 %v38, 2.0
    %v41 = vmul.f32 %v39, 2.0
    %v42 = vsub.f32 %v28, %v40
    %v43 = vsub.f32 %v29, %v41
    %v44 = vmul.f32 %v42, 2.0
    %v45 = vmul.f32 %v43, 2.0
    %v46 = vsub.f32 1.0, %v44
    %v47 = vsub.f32 1.0, %v45
    %v48 = vmul.f32 %v34, -2.505076e-08
    %v49 = vmul.f32 %v35, -2.505076e-08
    %v50 = vadd.f32 %v48, 2.7557314e-06
    %v51 = vadd.f32 %v49, 2.7557314e-06
    %v52 = vmul.f32 %v34, %v50
    %v53 = vmul.f32 %v35, %v51
    %v54 = vadd.f32 %v52, -0.00019841272
    %v55 = vadd.f32 %v53, -0.00019841272
    %v56 = vmul.f32 %v34, %v54
    %v57 = vmul.f32 %v35, %v55
    %v58 = vadd.f32 %v56, 0.008333331
    %v59 = vadd.f32 %v57, 0.008333331
    %v60 = vmul.f32 %v34, %v58
    %v61 = vmul.f32 %v35, %v59
    %v62 = vadd.f32 %v60, -0.16666667
    %v63 = vadd.f32 %v61, -0.16666667
    %v64 = vmul.f32 %v34, %v62
    %v65 = vmul.f32 %v35, %v63
    %v66 = vadd.f32 %v64, 1.0
    %v67 = vadd.f32 %v65, 1.0
    %v68 = vmul.f32 %v32, %v66
    %v69 = vmul.f32 %v33, %v67
    %v70 = vmul.f32 %v34, 2.0876758e-09
    %v71 = vmul.f32 %v35, 2.0876758e-09
    %v72 = vadd.f32 %v70, -2.755732e-07
    %v73 = vadd.f32 %v71, -2.755732e-07
    %v74 = vmul.f32 %v34, %v72
    %v75 = vmul.f32 %v35, %v73
    %v76 = vadd.f32 %v74, 2.4801588e-05
    %v77 = vadd.f32 %v75, 2.4801588e-05
    %v78 = vmul.f32 %v34, %v76
    %v79 = vmul.f32 %v35, %v77
    %v80 = vadd.f32 %v78, -0.0013888889
    %v81 = vadd.f32 %v79, -0.0013888889
    %v82 = vmul.f32 %v34, %v80
    %v83 = vmul.f32 %v35, %v81
    %v84 = vadd.f32 %v82, 0.041666668
    %v85 = vadd.f32 %v83, 0.041666668
    %v86 = vmul.f32 %v34, %v84
    %v87 = vmul.f32 %v35, %v85
    %v88 = vadd.f32 %v86, -0.5
    %v89 = vadd.f32 %v87, -0.5
    %v90 = vmul.f32 %v34, %v88
    %v91 = vmul.f32 %v35, %v89
    %v92 = vadd.f32 %v90, 1.0
    %v93 = vadd.f32 %v91, 1.0
    %v94 = vmul.f32 %v46, %v68
    %v95 = vmul.f32 %v47, %v69
    %96 = vst [vmem:[#allocation2] sm:$0xff] %v94
    %97 = vst [vmem:[#allocation2 + $0x8] sm:$0xff] %v95
    %v98 = vmul.f32 %v46, %v92
    %v99 = vmul.f32 %v47, %v93
    %100 = vst [vmem:[#allocation2 + $0x10] sm:$0xff] %v98
    %101 = vst [vmem:[#allocation2 + $0x18] sm:$0xff] %v99
    // Predicated region
    $region10: #{tpu_custom_call.1} parent=1 // pred_check
      _
    $region11: #{tpu_custom_call.1} parent=1 // pred_check_branch
      %103 = sbr.rel (0) target = $region13
    $region12: #{tpu_custom_call.1} parent=1 // pred_region
      %105 = vsyncadd [#allocation3], 0
      %s107 = sshll.u32 [#allocation2], 4
      %s108 = int_to_ptr.vmem [resolvable:$true] %s107
      %s109 = sshll.u32 %s2, 4
      %s110 = int_to_ptr.hbm [resolvable:$true] %s109
      %112 = dma.vmem_to_hbm [thread:$0]  %s108, 512, %s110, [#allocation3]
    $region13: #{tpu_custom_call.1} parent=1 // pred_fallthru
      _
    // Predicated region
    $region14: #{tpu_custom_call.1} parent=1 // pred_check
      _
    $region15: #{tpu_custom_call.1} parent=1 // pred_check_branch
      %114 = sbr.rel (0) target = $region17
    $region16: #{tpu_custom_call.1} parent=1 // pred_region
      %116 = dma.done [#allocation3], 512
    $region17: #{tpu_custom_call.1} parent=1 // pred_fallthru
      _
    %117 = vsyncpa [#allocation3], 1

</llo_original>
